<compile_context>
chip_gen: v6e
topology: v6e:2x2x1
jax: 0.10.0
libtpu: 0.0.40
codegen_flags: <defaults>
</compile_context>

<pallas_src>
import math

import jax
import jax.numpy as jnp
from jax import lax
from jax.experimental import pallas as pl
from jax.experimental.pallas import tpu as pltpu

BASE = 255.0
IMAGENET_MEAN = (0.485, 0.456, 0.406)   # cancels in (x - y); kept for the reference
IMAGENET_STD = (0.229, 0.224, 0.225)


def _round_up(a, b):
    return (a + b - 1) // b * b


def _make_psnr_partial_kernel(R, L, block_rows, block_lanes, scale2, n_channels):
    """Kernel computing, per row block, sum over its elements of
       (x - y)^2 * (std[channel] * base)^2  (masked to the true R x L extent)."""
    need_row_mask = (R % block_rows) != 0
    need_lane_mask = (L % block_lanes) != 0
    s2 = tuple(float(v) for v in scale2)          # Python floats -> literals only

    def kernel(x_ref, y_ref, out_ref, acc_ref):
        i = pl.program_id(0)          # row-block axis  ("parallel" -> megacore)
        j = pl.program_id(1)          # lane-block axis ("arbitrary" -> reduction)

        @pl.when(j == 0)
        def _():
            acc_ref[...] = jnp.zeros_like(acc_ref)

        d = x_ref[...].astype(jnp.float32) - y_ref[...].astype(jnp.float32)

        # Mask garbage out-of-bounds tails of boundary blocks (mask the diff
        # itself: OOB reads are unspecified and 0 * NaN would poison the sum).
        if need_row_mask or need_lane_mask:
            valid = None
            if need_row_mask:
                rows = i * block_rows + lax.broadcasted_iota(
                    jnp.int32, (block_rows, block_lanes), 0)
                valid = rows < R
            if need_lane_mask:
                lanes = j * block_lanes + lax.broadcasted_iota(
                    jnp.int32, (block_rows, block_lanes), 1)
                lane_ok = lanes < L
                valid = lane_ok if valid is None else (valid & lane_ok)
            d = jnp.where(valid, d, 0.0)

        # Hot path: VALU mul/add + one XLU lane reduce; fully hidden under the
        # input DMA (this kernel is HBM-bandwidth bound on all generations).
        acc_ref[...] += jnp.sum(d * d, axis=-1, keepdims=True)

        @pl.when(j == pl.num_programs(1) - 1)
        def _():
            # Per-channel (std*base)^2 generated in-kernel; rows are (N, C)
            # flattened so channel = global_row % n_channels.  Masked-out rows
            # have acc == 0, so any scale value there is harmless.
            row_ids = i * block_rows + lax.broadcasted_iota(
                jnp.int32, (block_rows, 1), 0)
            ch = row_ids % n_channels
            scale = jnp.where(ch == 0, s2[0], jnp.where(ch == 1, s2[1], s2[2]))
            out_ref[0, 0] = jnp.sum(acc_ref[...] * scale)

    return kernel


def peak_signal_noise_ratio(x, y, base=BASE, *, block_rows=None, block_lanes=None):
    """x, y: (N, C, H, W) with C == 3.  Returns scalar f32 PSNR."""
    N, C, H, W = x.shape
    assert C == len(IMAGENET_STD), "un_normalize assumes 3 channels"
    assert y.shape == x.shape
    n_elems = N * C * H * W

    R, L = N * C, H * W
    itemsize = jnp.dtype(x.dtype).itemsize

    # --- Tile sizing (no wrapper-side padding; tails are masked in-kernel). ---
    # ~4 MiB per input block: 2 inputs x 2 pipeline buffers ~16 MiB plus
    # in-kernel f32 temporaries, comfortably under the explicit 48 MiB scoped
    # VMEM limit below on v5e/v6e/v7x.
    target_bytes = 4 << 20

    if block_lanes is None:
        # Lane (last-dim) tiling: multiple of 128, bounded so even a minimal
        # 8-row block stays under target; if the whole L fits, keep a single
        # full-width block (full-dim blocks are exempt from the 128 rule).
        max_lanes = max(128, (target_bytes // (8 * itemsize)) // 128 * 128)
        block_lanes = L if _round_up(L, 128) <= max_lanes else max_lanes
    n_lane_blocks = pl.cdiv(L, block_lanes)

    if block_rows is None:
        # Row tiling: multiple of 8 filling the remaining budget (full-dim if
        # the whole row extent fits in one block).
        rows_budget = max(8, (target_bytes // (block_lanes * itemsize)) // 8 * 8)
        block_rows = R if rows_budget >= R else rows_budget
    n_row_blocks = pl.cdiv(R, block_rows)

    # Contiguous reshape only -- no HBM copy, no padding.
    x2 = x.reshape(R, L)
    y2 = y.reshape(R, L)

    scale2 = tuple((s * float(base)) ** 2 for s in IMAGENET_STD)
    kernel = _make_psnr_partial_kernel(R, L, block_rows, block_lanes, scale2, C)

    partials = pl.pallas_call(
        kernel,
        out_shape=jax.ShapeDtypeStruct((n_row_blocks, 1), jnp.float32),
        grid=(n_row_blocks, n_lane_blocks),
        in_specs=[
            pl.BlockSpec((block_rows, block_lanes), lambda i, j: (i, j)),
            pl.BlockSpec((block_rows, block_lanes), lambda i, j: (i, j)),
        ],
        out_specs=pl.BlockSpec((1, 1), lambda i, j: (i, 0),
                               memory_space=pltpu.MemorySpace.SMEM),
        scratch_shapes=[pltpu.VMEM((block_rows, 1), jnp.float32)],
        compiler_params=pltpu.CompilerParams(
            # Row blocks are independent partial sums -> "parallel" (2x on
            # v7x's two TensorCores); the lane axis carries the accumulator
            # -> "arbitrary" and sits last (reduction-axis-last convention).
            dimension_semantics=("parallel", "arbitrary"),
            vmem_limit_bytes=48 * 1024 * 1024,
        ),
    )(x2, y2)

    # Tiny scalar epilogue in plain XLA (keeps the kernel critical path = DMA).
    mse = jnp.sum(partials) / jnp.float32(n_elems)
    # 20*log10(base/sqrt(mse)) == 20*log10(base) - 10*log10(mse)
    psnr = 20.0 * math.log10(base) - 10.0 * jnp.log10(mse)
    return jnp.where(mse == 0.0, jnp.float32(100.0), psnr).astype(jnp.float32)


def _reference_psnr(x, y, base=BASE):
    mean = jnp.asarray(IMAGENET_MEAN, jnp.float32).reshape(1, 3, 1, 1)
    std = jnp.asarray(IMAGENET_STD, jnp.float32).reshape(1, 3, 1, 1)
    xu = (x.astype(jnp.float32) * std + mean) * base
    yu = (y.astype(jnp.float32) * std + mean) * base
    mse = jnp.mean((xu - yu) ** 2)
    return jnp.where(mse == 0.0, 100.0, 20.0 * jnp.log10(base / jnp.sqrt(mse)))


if __name__ == "__main__":
    key = jax.random.PRNGKey(0)
    kx, ky = jax.random.split(key)

    # Small 3-channel image batch consistent with the module.
    x = jax.random.normal(kx, (2, 3, 16, 16), dtype=jnp.float32)
    y = x + 0.05 * jax.random.normal(ky, (2, 3, 16, 16), dtype=jnp.float32)

    psnr = peak_signal_noise_ratio(x, y)
    jax.block_until_ready(psnr)
    ref = _reference_psnr(x, y)
    assert jnp.allclose(psnr, ref, rtol=1e-4, atol=1e-4), (psnr, ref)

    # Exercise the boundary-block masking path (row & lane tails): R=12 rows /
    # L=130 lanes streamed through forced 8x128 blocks (grid 2x2).
    kx2, ky2 = jax.random.split(ky)
    xt = jax.random.normal(kx2, (4, 3, 10, 13), dtype=jnp.float32)
    yt = xt + 0.1 * jax.random.normal(ky2, (4, 3, 10, 13), dtype=jnp.float32)
    psnr_t = peak_signal_noise_ratio(xt, yt, block_rows=8, block_lanes=128)
    jax.block_until_ready(psnr_t)
    ref_t = _reference_psnr(xt, yt)
    assert jnp.allclose(psnr_t, ref_t, rtol=1e-4, atol=1e-4), (psnr_t, ref_t)

    print("KERNEL_OK")
</pallas_src>

<mosaic_0001>
module attributes {stable_mosaic.version = 11 : i64} {
  func.func @kernel(%arg0: i32, %arg1: i32, %arg2: memref<6x256xf32, #tpu.memory_space<vmem>>, %arg3: memref<6x256xf32, #tpu.memory_space<vmem>>, %arg4: memref<1x1xf32, #tpu.memory_space<smem>>, %arg5: memref<6x1xf32, #tpu.memory_space<vmem>>) attributes {dimension_semantics = [#tpu.dimension_semantics<parallel>, #tpu.dimension_semantics<arbitrary>], iteration_bounds = array<i64: 1, 1>, scalar_prefetch = 0 : i64, scratch_operands = 1 : i64, tpu.core_type = #tpu.core_type<tc>, window_params = [{transform_indices = @transform_0, window_bounds = array<i64: 6, 256>}, {transform_indices = @transform_1, window_bounds = array<i64: 6, 256>}, {transform_indices = @transform_2, window_bounds = array<i64: 1, 1>}]} {
    %c0_i32 = arith.constant 0 : i32
    %0 = arith.cmpi eq, %arg1, %c0_i32 : i32
    %1 = arith.extui %0 : i1 to i32
    %c0_i32_0 = arith.constant 0 : i32
    %2 = arith.cmpi ne, %1, %c0_i32_0 : i32
    scf.if %2 {
      %cst_10 = arith.constant 0.000000e+00 : f32
      %15 = vector.broadcast %cst_10 : f32 to vector<6x1xf32>
      %c0_11 = arith.constant 0 : index
      %c0_12 = arith.constant 0 : index
      %16 = vector.load %arg5[%c0_11, %c0_12] : memref<6x1xf32, #tpu.memory_space<vmem>>, vector<6x1xf32>
      tpu.vector_store %arg5[%c0_11, %c0_12], %15 {strides = array<i32>} : memref<6x1xf32, #tpu.memory_space<vmem>>, vector<6x1xf32>,
    } else {
    }
    %c0 = arith.constant 0 : index
    %c0_1 = arith.constant 0 : index
    %3 = vector.load %arg2[%c0, %c0_1] : memref<6x256xf32, #tpu.memory_space<vmem>>, vector<6x256xf32>
    %c0_2 = arith.constant 0 : index
    %c0_3 = arith.constant 0 : index
    %4 = vector.load %arg3[%c0_2, %c0_3] : memref<6x256xf32, #tpu.memory_space<vmem>>, vector<6x256xf32>
    %5 = arith.subf %3, %4 : vector<6x256xf32>
    %c0_4 = arith.constant 0 : index
    %c0_5 = arith.constant 0 : index
    %6 = vector.load %arg5[%c0_4, %c0_5] : memref<6x1xf32, #tpu.memory_space<vmem>>, vector<6x1xf32>
    %7 = arith.mulf %5, %5 : vector<6x256xf32>
    %cst = arith.constant dense<0.000000e+00> : vector<6xf32>
    %8 = vector.multi_reduction <add>, %7, %cst [1] : vector<6x256xf32> to vector<6xf32>
    %9 = vector.shape_cast %8 : vector<6xf32> to vector<6x1xf32>
    %10 = arith.addf %6, %9 : vector<6x1xf32>
    %c0_6 = arith.constant 0 : index
    %c0_7 = arith.constant 0 : index
    %11 = vector.load %arg5[%c0_6, %c0_7] : memref<6x1xf32, #tpu.memory_space<vmem>>, vector<6x1xf32>
    tpu.vector_store %arg5[%c0_6, %c0_7], %10 {strides = array<i32>} : memref<6x1xf32, #tpu.memory_space<vmem>>, vector<6x1xf32>,
    %c0_i32_8 = arith.constant 0 : i32
    %12 = arith.cmpi eq, %arg1, %c0_i32_8 : i32
    %13 = arith.extui %12 : i1 to i32
    %c0_i32_9 = arith.constant 0 : i32
    %14 = arith.cmpi ne, %13, %c0_i32_9 : i32
    scf.if %14 {
      %c6_i32 = arith.constant 6 : i32
      %15 = arith.muli %arg0, %c6_i32 : i32
      %16 = tpu.iota {dimensions = array<i32: 0>} : vector<6x1xi32>
      %17 = vector.broadcast %15 : i32 to vector<6x1xi32>
      %18 = arith.addi %17, %16 : vector<6x1xi32>
      %c3_i32 = arith.constant 3 : i32
      %c0_i32_10 = arith.constant 0 : i32
      %19 = arith.cmpi eq, %c3_i32, %c0_i32_10 : i32
      %c1_i32 = arith.constant 1 : i32
      %20 = arith.select %19, %c1_i32, %c3_i32 : i32
      %21 = vector.broadcast %20 : i32 to vector<6x1xi32>
      %22 = arith.remsi %18, %21 : vector<6x1xi32>
      %c0_i32_11 = arith.constant 0 : i32
      %23 = vector.broadcast %c0_i32_11 : i32 to vector<6x1xi32>
      %24 = arith.cmpi ne, %22, %23 : vector<6x1xi32>
      %c0_i32_12 = arith.constant 0 : i32
      %25 = vector.broadcast %c0_i32_12 : i32 to vector<6x1xi32>
      %26 = arith.cmpi slt, %22, %25 : vector<6x1xi32>
      %c0_i32_13 = arith.constant 0 : i32
      %27 = arith.cmpi slt, %20, %c0_i32_13 : i32
      %28 = vector.broadcast %27 : i1 to vector<6x1xi1>
      %29 = vector.broadcast %28 : vector<6x1xi1> to vector<6x1xi1>
      %30 = arith.xori %26, %29 : vector<6x1xi1>
      %31 = arith.andi %30, %24 : vector<6x1xi1>
      %32 = vector.broadcast %20 : i32 to vector<6x1xi32>
      %33 = arith.addi %22, %32 : vector<6x1xi32>
      %34 = arith.select %31, %33, %22 : vector<6x1xi1>, vector<6x1xi32>
      %c0_i32_14 = arith.constant 0 : i32
      %35 = vector.broadcast %c0_i32_14 : i32 to vector<6x1xi32>
      %36 = arith.cmpi eq, %34, %35 : vector<6x1xi32>
      %c1_i32_15 = arith.constant 1 : i32
      %37 = vector.broadcast %c1_i32_15 : i32 to vector<6x1xi32>
      %38 = arith.cmpi eq, %34, %37 : vector<6x1xi32>
      %cst_16 = arith.constant 3262.69434 : f32
      %cst_17 = arith.constant 3291.89063 : f32
      %39 = vector.broadcast %cst_16 : f32 to vector<6x1xf32>
      %40 = vector.broadcast %cst_17 : f32 to vector<6x1xf32>
      %41 = arith.select %38, %39, %40 : vector<6x1xi1>, vector<6x1xf32>
      %cst_18 = arith.constant 3409.97607 : f32
      %42 = vector.broadcast %cst_18 : f32 to vector<6x1xf32>
      %43 = arith.select %36, %42, %41 : vector<6x1xi1>, vector<6x1xf32>
      %c0_19 = arith.constant 0 : index
      %c0_20 = arith.constant 0 : index
      %44 = vector.load %arg5[%c0_19, %c0_20] : memref<6x1xf32, #tpu.memory_space<vmem>>, vector<6x1xf32>
      %45 = arith.mulf %44, %43 : vector<6x1xf32>
      %46 = vector.shape_cast %45 : vector<6x1xf32> to vector<1x6x1xf32>
      %cst_21 = arith.constant dense<0.000000e+00> : vector<1xf32>
      %47 = vector.multi_reduction <add>, %46, %cst_21 [1, 2] : vector<1x6x1xf32> to vector<1xf32>
      %48 = vector.shape_cast %47 : vector<1xf32> to vector<1x1x1xf32>
      %49 = vector.extract %48[0, 0, 0] : f32 from vector<1x1x1xf32>
      %c0_22 = arith.constant 0 : index
      %c0_23 = arith.constant 0 : index
      %50 = memref.load %arg4[%c0_22, %c0_23] : memref<1x1xf32, #tpu.memory_space<smem>>
      memref.store %49, %arg4[%c0_22, %c0_23] : memref<1x1xf32, #tpu.memory_space<smem>>
    } else {
    }
    return
  }
  func.func @transform_0(%arg0: i32, %arg1: i32) -> (i32, i32) {
    %c0_i32 = arith.constant 0 : i32
    return %arg0, %arg1 : i32, i32
  }
  func.func @transform_1(%arg0: i32, %arg1: i32) -> (i32, i32) {
    %c0_i32 = arith.constant 0 : i32
    return %arg0, %arg1 : i32, i32
  }
  func.func @transform_2(%arg0: i32, %arg1: i32) -> (i32, i32) {
    %c0_i32 = arith.constant 0 : i32
    %c0_i32_0 = arith.constant 0 : i32
    return %arg0, %c0_i32 : i32, i32
  }
}

</mosaic_0001>

<llo_original>
// kernel: tpu_custom_call.1
$region0: #{tpu_custom_call.1}
  #allocation0 [shape = 'u32[]', space=smem, size = 0x4, offset = 0x4, fixed_abs, tag = 'smem constant byte address 0x4 - core index']
  #allocation1 [shape = 'u32[144,128]{1,0:T(1,128)}', space=vmem, size = 0x12000, scoped, tag = 'internal scratch']
  #allocation2 [shape = 'f32[6,1]{1,0:T(8,128)}', space=vmem, size = 0x1000, scoped, tag = 'scratch operand']
  %s0 = inlined_call_operand.hbm [shape: f32[6,256], index: 0, kind: input, shape index: {}]
  %s1 = inlined_call_operand.hbm [shape: f32[6,256], index: 1, kind: input, shape index: {}]
  %s2 = inlined_call_operand.hbm [shape: f32[1,1], index: 2, kind: output, shape index: {}]
  %s3 = sld [smem:[#allocation0]]
  $region34: #{tpu_custom_call.1} parent=0
    _
  %s5 = ssub.s32 1, %s3
  %s6 = scalar_select 0, %s5, %s3
  $region1: #{tpu_custom_call.1} parent=0
    #allocation3 [shape = 'u8[8192]{0}', space=vmem, size = 0x2000, scoped, tag = 'input window, operand 0, single buffered']
    #allocation4 [shape = 's32[1]{0}', space=sflag, size = 0x4, scoped, tag = 'scoped memory for tpu_custom_call.1']
    #allocation5 [shape = 's32[1]{0}', space=sflag, size = 0x4, scoped, tag = 'scoped memory for tpu_custom_call.1']
    #allocation6 [shape = 'u8[8192]{0}', space=vmem, size = 0x2000, scoped, tag = 'input window, operand 1, single buffered']
    #allocation7 [shape = 's32[1]{0}', space=sflag, size = 0x4, scoped, tag = 'scoped memory for tpu_custom_call.1']
    #allocation8 [shape = 'u8[512]{0}', space=smem, size = 0x200, scoped, tag = 'output window, operand 0, single buffered']
    %7 = vsyncpa [#allocation4], 0
    %8 = vsyncpa [#allocation7], 0
    %9 = vsyncpa [#allocation5], 0
    // Predicated region
    $region2: #{tpu_custom_call.1} parent=1 // pred_check
      _
    $region3: #{tpu_custom_call.1} parent=1 // pred_check_branch
      %11 = sbr.rel (0) target = $region5
    $region4: #{tpu_custom_call.1} parent=1 // pred_region
      %s13 = ssub.s32 256, 256
      %14 = vsyncadd [#allocation4], %s13
      %s16 = sshll.u32 [#allocation3], 4
      %s17 = int_to_ptr.vmem [resolvable:$true] %s16
      %19 = dma.hbm_to_vmem [thread:$0]  %s0, 256, %s17, [#allocation4]
    $region5: #{tpu_custom_call.1} parent=1 // pred_fallthru
      _
    // Predicated region
    $region6: #{tpu_custom_call.1} parent=1 // pred_check
      _
    $region7: #{tpu_custom_call.1} parent=1 // pred_check_branch
      %21 = sbr.rel (0) target = $region9
    $region8: #{tpu_custom_call.1} parent=1 // pred_region
      %s23 = ssub.s32 256, 256
      %24 = vsyncadd [#allocation7], %s23
      %s26 = sshll.u32 [#allocation6], 4
      %s27 = int_to_ptr.vmem [resolvable:$true] %s26
      %29 = dma.hbm_to_vmem [thread:$0]  %s1, 256, %s27, [#allocation7]
    $region9: #{tpu_custom_call.1} parent=1 // pred_fallthru
      _
    // Predicated region
    $region10: #{tpu_custom_call.1} parent=1 // pred_check
      _
    $region11: #{tpu_custom_call.1} parent=1 // pred_check_branch
      %31 = sbr.rel (0) target = $region13
    $region12: #{tpu_custom_call.1} parent=1 // pred_region
      %32 = dma.done [#allocation4], 256
    $region13: #{tpu_custom_call.1} parent=1 // pred_fallthru
      _
    // Predicated region
    $region14: #{tpu_custom_call.1} parent=1 // pred_check
      _
    $region15: #{tpu_custom_call.1} parent=1 // pred_check_branch
      %34 = sbr.rel (0) target = $region17
    $region16: #{tpu_custom_call.1} parent=1 // pred_region
      %35 = dma.done [#allocation7], 256
    $region17: #{tpu_custom_call.1} parent=1 // pred_fallthru
      _
    %p36 = scmp.eq.s32.totalorder 0, 0
    // Predicated region
    $region18: #{tpu_custom_call.1} parent=1 // pred_check
      %p37 = pneg %p36
    $region19: #{tpu_custom_call.1} parent=1 // pred_check_branch
      %39 = sbr.rel (%p37) target = $region21
    $region20: #{tpu_custom_call.1} parent=1 // pred_region
      %vm40 = vcmask 5120
      %41 = vst.msk [vmem:[#allocation2] sm:$0x3f] %vm40, 0.0
    $region21: #{tpu_custom_call.1} parent=1 // pred_fallthru
      _
    %v42 = vld [vmem:[#allocation3] sm:$0x3f]
    %v43 = vld [vmem:[#allocation3 + $0x8] sm:$0x3f]
    %v44 = vld [vmem:[#allocation6] sm:$0x3f]
    %v45 = vld [vmem:[#allocation6 + $0x8] sm:$0x3f]
    %v46 = vsub.f32 %v42, %v44
    %v47 = vsub.f32 %v43, %v45
    %v48 = vld [vmem:[#allocation2] sm:$0x3f]
    %v49 = vmul.f32 %v46, %v46
    %v50 = vmul.f32 %v47, %v47
    %vm51 = vcmask 1045504
    %v52 = vsel %vm51, %v49, 0.0
    %v53 = vsel %vm51, %v50, 0.0
    %v54 = vadd.f32 %v52, %v53
    %55 = vadd.xlane.f32.xlu0 %v54
    %v56 = vpop.xlane.xlu0 %55
    %v57 = vadd.f32 %v48, %v56
    %vm58 = vcmask 5120
    %59 = vst.msk [vmem:[#allocation2] sm:$0x3f] %vm58, %v57
    // Predicated region
    $region22: #{tpu_custom_call.1} parent=1 // pred_check
      %p60 = pneg %p36
    $region23: #{tpu_custom_call.1} parent=1 // pred_check_branch
      %62 = sbr.rel (%p60) target = $region25
    $region24: #{tpu_custom_call.1} parent=1 // pred_region
      %s63 = smul.u32 0, 6
      %v64 = vlaneseq
      %v65 = vshrl.u32 %v64, 7
      %v66 = vstv %s63
      %v67 = vadd.s32 %v66, %v65
      %vm68 = vcmp.lt.s32.totalorder %v67, 0
      %v69 = vsub.s32 0, %v67
      %v70 = vsel %vm68, %v69, %v67
      %v71 = vmul.u32.u64.compose %v70, 2863311531
      %v72 = vextract.low.u32 %v71
      %v73 = vextract.high.u32 %v71
      %v74 = vshrl.u32 %v73, 1
      %v75 = vmul.u32 %v74, 3
      %v76 = vsub.s32 %v70, %v75
      %v77 = vsub.s32 0, %v76
      %v78 = vsel %vm68, %v77, %v76
      %vm79 = vcmp.ne.s32.totalorder %v78, 0
      %vm80 = vcmp.lt.s32.totalorder %v78, 0
      %vm81 = vmand %vm80, %vm79
      %v82 = vadd.s32 %v78, 3
      %v83 = vsel %vm81, %v82, %v78
      %vm84 = vcmp.eq.s32.totalorder %v83, 0
      %vm85 = vcmp.eq.s32.totalorder %v83, 1
      %v86 = vsel %vm85, 3262.6943, 3291.8906
      %v87 = vsel %vm84, 3409.976, %v86
      %v88 = vld [vmem:[#allocation2] sm:$0x3f]
      %v89 = vmul.f32 %v88, %v87
      %v90 = vsel %vm58, %v89, 0.0
      %91 = vadd.xlane.f32.xlu0 %v90
      %v92 = vpop.xlane.xlu0 %91
      %v93 = vrot.slane %v92, 4
      %v94 = vadd.f32 %v92, %v93
      %v95 = vrot.slane %v94, 2
      %v96 = vadd.f32 %v94, %v95
      %v97 = vrot.slane %v96, 1
      %v98 = vadd.f32 %v96, %v97
      %s99 = vtos %v98
      %s100 = scalar_lea.smem [#allocation8], 0
      %101 = sst [smem:[%s100]] %s99
    $region25: #{tpu_custom_call.1} parent=1 // pred_fallthru
      _
    // Predicated region
    $region26: #{tpu_custom_call.1} parent=1 // pred_check
      _
    $region27: #{tpu_custom_call.1} parent=1 // pred_check_branch
      %103 = sbr.rel (0) target = $region29
    $region28: #{tpu_custom_call.1} parent=1 // pred_region
      %s105 = ssub.s32 16, 16
      %106 = vsyncadd [#allocation5], %s105
      %109 = dma.smem_to_hbm [#allocation8], 16, %s2, [#allocation5]
    $region29: #{tpu_custom_call.1} parent=1 // pred_fallthru
      _
    // Predicated region
    $region30: #{tpu_custom_call.1} parent=1 // pred_check
      _
    $region31: #{tpu_custom_call.1} parent=1 // pred_check_branch
      %111 = sbr.rel (0) target = $region33
    $region32: #{tpu_custom_call.1} parent=1 // pred_region
      %112 = dma.done [#allocation5], 16
    $region33: #{tpu_custom_call.1} parent=1 // pred_fallthru
      _
    %113 = sfence
    %114 = vsyncpa [#allocation4], 1
    %115 = vsyncpa [#allocation7], 1
    %116 = vsyncpa [#allocation5], 1

</llo_original>
